<compile_context>
chip_gen: v6e
topology: v6e:2x2x1
jax: 0.10.0
libtpu: 0.0.40
codegen_flags: <defaults>
</compile_context>

<pallas_src>
import jax
import jax.numpy as jnp
from jax.experimental import pallas as pl
from jax.experimental.pallas import tpu as pltpu

NUM_LABELS = 4
IN_FEATURES = 768
HIDDEN = 256
LANE = 128            # lane-dense padded width used for fc2/softmax COMPUTE only
NEG_INF = -1e30       # bias for padded logit lanes -> exp underflows to exactly 0 (f32)


def _round_up(x, m):
    return ((x + m - 1) // m) * m


def moe_classifier_kernel(x_ref, w1_ref, b1_ref, w2_ref, b2_ref, o_ref):
    # x tile: (TB, 768) in VMEM, f32 or bf16.  Cast the MXU operand to bf16 only
    # if the caller streamed f32 (dtype is static -> trace-time branch).
    x = x_ref[...]
    if x.dtype != jnp.bfloat16:
        x = x.astype(jnp.bfloat16)

    # fc1: (TB, 768) @ (768, 256) bf16 operands, f32 accumulation on the MXU.
    h = jnp.dot(x, w1_ref[...], preferred_element_type=jnp.float32) + b1_ref[...]

    # LeakyReLU(negative_slope=0.1), f32 on the VPU.
    h = jnp.where(h >= 0.0, h, 0.1 * h)

    # Dropout(p=0.2): identity in eval/inference mode.
    # TODO(synk): training-mode dropout (prng mask + 1/(1-p) scale) not implemented.

    # fc2 padded to 128 compute lanes: (TB, 256) @ (256, 128) bf16, f32 acc.
    # Padded lanes carry bias = -1e30 (f32) so they get exactly 0 softmax mass.
    logits = jnp.dot(h.astype(jnp.bfloat16), w2_ref[...],
                     preferred_element_type=jnp.float32) + b2_ref[...]

    # Numerically stable softmax over the (padded) label axis.  Exact f32 divide
    # so each row sums to 1 at f32 precision (fixes the row-sum assertion).
    m = jnp.max(logits, axis=1, keepdims=True)
    e = jnp.exp(logits - m)
    denom = jnp.sum(e, axis=1, keepdims=True)

    # Store only the real labels: (TB, NUM_LABELS) -> narrow HBM writeback.
    o_ref[...] = (e[:, :NUM_LABELS] / denom).astype(o_ref.dtype)


def simple_moe_classifier(x, w1, b1, w2, b2, *, tb=1024):
    """x: (B, 768) f32 or bf16.  w1: (768, 256), b1: (1, 256), w2: (256, 4), b2: (1, 4).

    Returns (B, NUM_LABELS) f32 softmax probabilities.
    """
    B = x.shape[0]

    # fc1/fc2 weights live in HBM as bf16 (half the DMA bytes; f32 accumulation
    # in-kernel).  fc2 is padded to a lane-dense 128-wide compute tile; padded
    # bias lanes are -1e30 (kept in f32) so their softmax probability is 0.
    w1_bf16 = w1.astype(jnp.bfloat16)
    w2p = (jnp.zeros((HIDDEN, LANE), jnp.float32)
           .at[:, :NUM_LABELS].set(w2).astype(jnp.bfloat16))
    b2p = jnp.full((1, LANE), NEG_INF, jnp.float32).at[:, :NUM_LABELS].set(b2)

    # Batch tile: multiple of 8 rows, capped so the grid has >= 2 steps whenever
    # possible (both v7x TensorCores get work).  No jnp.pad of x: Pallas handles
    # the ragged last tile (OOB output rows are masked on write).
    TB = min(tb, max(8, _round_up(pl.cdiv(B, 2), 8)))
    grid = (pl.cdiv(B, TB),)

    out = pl.pallas_call(
        moe_classifier_kernel,
        out_shape=jax.ShapeDtypeStruct((B, NUM_LABELS), jnp.float32),
        grid_spec=pltpu.PrefetchScalarGridSpec(
            num_scalar_prefetch=0,
            grid=grid,
            in_specs=[
                pl.BlockSpec((TB, IN_FEATURES), lambda i: (i, 0)),       # x: streamed
                pl.BlockSpec((IN_FEATURES, HIDDEN), lambda i: (0, 0)),   # w1 (bf16): resident
                pl.BlockSpec((1, HIDDEN), lambda i: (0, 0)),             # b1: resident
                pl.BlockSpec((HIDDEN, LANE), lambda i: (0, 0)),          # w2 (padded bf16): resident
                pl.BlockSpec((1, LANE), lambda i: (0, 0)),               # b2 (padded f32): resident
            ],
            out_specs=pl.BlockSpec((TB, NUM_LABELS), lambda i: (i, 0)),  # narrow f32 writeback
        ),
        compiler_params=pltpu.CompilerParams(
            dimension_semantics=("parallel",),        # shard batch tiles across TCs (v7x)
            vmem_limit_bytes=32 * 1024 * 1024,        # safe on v5e/v6e/v7x at TB<=1024
        ),
    )(x, w1_bf16, b1, w2p, b2p)

    return out


def init_params(key):
    """Deterministic init mimicking nn.Linear's U(-1/sqrt(fan_in), 1/sqrt(fan_in))."""
    k1, k2, k3, k4 = jax.random.split(key, 4)
    bound1 = 1.0 / (IN_FEATURES ** 0.5)
    bound2 = 1.0 / (HIDDEN ** 0.5)
    w1 = jax.random.uniform(k1, (IN_FEATURES, HIDDEN), jnp.float32, -bound1, bound1)
    b1 = jax.random.uniform(k2, (1, HIDDEN), jnp.float32, -bound1, bound1)
    w2 = jax.random.uniform(k3, (HIDDEN, NUM_LABELS), jnp.float32, -bound2, bound2)
    b2 = jax.random.uniform(k4, (1, NUM_LABELS), jnp.float32, -bound2, bound2)
    return w1, b1, w2, b2


def reference(x, w1, b1, w2, b2):
    x = x.astype(jnp.float32)
    h = x @ w1 + b1
    h = jnp.where(h >= 0, h, 0.1 * h)
    logits = h @ w2 + b2
    return jax.nn.softmax(logits, axis=1)


if __name__ == "__main__":
    key = jax.random.PRNGKey(0)
    k_x, k_p = jax.random.split(key)
    w1, b1, w2, b2 = init_params(k_p)

    # --- Run 1: small single-tile run (B=8 -> TB=8, grid=(1,)), f32 x. ---
    B = 8
    x = jax.random.normal(k_x, (B, IN_FEATURES), jnp.float32)
    out = jax.block_until_ready(simple_moe_classifier(x, w1, b1, w2, b2))
    ref = reference(x, w1, b1, w2, b2)
    assert out.shape == (B, NUM_LABELS)
    # bf16 fc1/fc2 MXU operands -> relaxed tolerance vs the f32 reference.
    assert jnp.allclose(out, ref, atol=1e-2, rtol=0), "mismatch vs JAX reference (B=8)"
    # Exact f32 normalization -> rows sum to 1 tightly.
    assert jnp.allclose(jnp.sum(out, axis=1), jnp.ones((B,)), atol=1e-3)

    # --- Run 2: ragged multi-tile run (B=20 -> TB=16, grid=(2,)), no jnp.pad. ---
    B2 = 20
    x2 = jax.random.normal(jax.random.PRNGKey(1), (B2, IN_FEATURES), jnp.float32)
    out2 = jax.block_until_ready(simple_moe_classifier(x2, w1, b1, w2, b2))
    ref2 = reference(x2, w1, b1, w2, b2)
    assert out2.shape == (B2, NUM_LABELS)
    assert jnp.allclose(out2, ref2, atol=1e-2, rtol=0), "mismatch vs JAX reference (B=20)"
    assert jnp.allclose(jnp.sum(out2, axis=1), jnp.ones((B2,)), atol=1e-3)

    # --- Run 3: bf16 activations streamed straight through (upstream bf16 producer). ---
    x3 = x.astype(jnp.bfloat16)
    out3 = jax.block_until_ready(simple_moe_classifier(x3, w1, b1, w2, b2))
    assert out3.shape == (B, NUM_LABELS)
    assert jnp.allclose(out3, ref, atol=2e-2, rtol=0), "mismatch vs JAX reference (bf16 x)"
    assert jnp.allclose(jnp.sum(out3, axis=1), jnp.ones((B,)), atol=1e-3)

    print("KERNEL_OK")
</pallas_src>

<mosaic_0001>
module attributes {stable_mosaic.version = 11 : i64} {
  func.func @moe_classifier_kernel(%arg0: i32, %arg1: memref<8x768xf32, #tpu.memory_space<vmem>>, %arg2: memref<768x256xbf16, #tpu.memory_space<vmem>>, %arg3: memref<1x256xf32, #tpu.memory_space<vmem>>, %arg4: memref<256x128xbf16, #tpu.memory_space<vmem>>, %arg5: memref<1x128xf32, #tpu.memory_space<vmem>>, %arg6: memref<8x4xf32, #tpu.memory_space<vmem>>) attributes {dimension_semantics = [#tpu.dimension_semantics<parallel>], iteration_bounds = array<i64: 1>, scalar_prefetch = 0 : i64, scratch_operands = 0 : i64, tpu.core_type = #tpu.core_type<tc>, window_params = [{transform_indices = @transform_0, window_bounds = array<i64: 8, 768>}, {pipeline_mode = #tpu.pipeline_mode<synchronous>, transform_indices = @transform_1, window_bounds = array<i64: 768, 256>}, {pipeline_mode = #tpu.pipeline_mode<synchronous>, transform_indices = @transform_2, window_bounds = array<i64: 1, 256>}, {pipeline_mode = #tpu.pipeline_mode<synchronous>, transform_indices = @transform_3, window_bounds = array<i64: 256, 128>}, {pipeline_mode = #tpu.pipeline_mode<synchronous>, transform_indices = @transform_4, window_bounds = array<i64: 1, 128>}, {transform_indices = @transform_5, window_bounds = array<i64: 8, 4>}]} {
    %c0 = arith.constant 0 : index
    %c0_0 = arith.constant 0 : index
    %0 = vector.load %arg1[%c0, %c0_0] : memref<8x768xf32, #tpu.memory_space<vmem>>, vector<8x768xf32>
    %1 = arith.truncf %0 : vector<8x768xf32> to vector<8x768xbf16>
    %c0_1 = arith.constant 0 : index
    %c0_2 = arith.constant 0 : index
    %2 = vector.load %arg2[%c0_1, %c0_2] : memref<768x256xbf16, #tpu.memory_space<vmem>>, vector<768x256xbf16>
    %cst = arith.constant dense<0.000000e+00> : vector<8x256xf32>
    %3 = tpu.matmul %1, %2, %cst {dimension_numbers = #tpu.dot_dimension_numbers<[1], [0], [0], [1], [0, 0, 1, 1], [], []>} : vector<8x768xbf16>, vector<768x256xbf16>, vector<8x256xf32> -> vector<8x256xf32>
    %c0_3 = arith.constant 0 : index
    %c0_4 = arith.constant 0 : index
    %4 = vector.load %arg3[%c0_3, %c0_4] : memref<1x256xf32, #tpu.memory_space<vmem>>, vector<1x256xf32>
    %5 = vector.broadcast %4 : vector<1x256xf32> to vector<8x256xf32>
    %6 = arith.addf %3, %5 : vector<8x256xf32>
    %cst_5 = arith.constant 0.000000e+00 : f32
    %7 = vector.broadcast %cst_5 : f32 to vector<8x256xf32>
    %8 = arith.cmpf oge, %6, %7 : vector<8x256xf32>
    %cst_6 = arith.constant 1.000000e-01 : f32
    %9 = vector.broadcast %cst_6 : f32 to vector<8x256xf32>
    %10 = arith.mulf %9, %6 : vector<8x256xf32>
    %11 = arith.select %8, %6, %10 : vector<8x256xi1>, vector<8x256xf32>
    %12 = arith.truncf %11 : vector<8x256xf32> to vector<8x256xbf16>
    %c0_7 = arith.constant 0 : index
    %c0_8 = arith.constant 0 : index
    %13 = vector.load %arg4[%c0_7, %c0_8] : memref<256x128xbf16, #tpu.memory_space<vmem>>, vector<256x128xbf16>
    %cst_9 = arith.constant dense<0.000000e+00> : vector<8x128xf32>
    %14 = tpu.matmul %12, %13, %cst_9 {dimension_numbers = #tpu.dot_dimension_numbers<[1], [0], [0], [1], [0, 0, 1, 1], [], []>} : vector<8x256xbf16>, vector<256x128xbf16>, vector<8x128xf32> -> vector<8x128xf32>
    %c0_10 = arith.constant 0 : index
    %c0_11 = arith.constant 0 : index
    %15 = vector.load %arg5[%c0_10, %c0_11] : memref<1x128xf32, #tpu.memory_space<vmem>>, vector<1x128xf32>
    %16 = vector.broadcast %15 : vector<1x128xf32> to vector<8x128xf32>
    %17 = arith.addf %14, %16 : vector<8x128xf32>
    %cst_12 = arith.constant dense<0xFF800000> : vector<8xf32>
    %18 = vector.multi_reduction <maximumf>, %17, %cst_12 [1] : vector<8x128xf32> to vector<8xf32>
    %19 = vector.shape_cast %18 : vector<8xf32> to vector<8x1xf32>
    %20 = vector.broadcast %19 : vector<8x1xf32> to vector<8x128xf32>
    %21 = arith.subf %17, %20 : vector<8x128xf32>
    %22 = math.exp %21 : vector<8x128xf32>
    %cst_13 = arith.constant dense<0.000000e+00> : vector<8xf32>
    %23 = vector.multi_reduction <add>, %22, %cst_13 [1] : vector<8x128xf32> to vector<8xf32>
    %24 = vector.shape_cast %23 : vector<8xf32> to vector<8x1xf32>
    %25 = vector.extract_strided_slice %22 {offsets = [0, 0], sizes = [8, 4], strides = [1, 1]} : vector<8x128xf32> to vector<8x4xf32>
    %26 = vector.broadcast %24 : vector<8x1xf32> to vector<8x4xf32>
    %27 = arith.divf %25, %26 : vector<8x4xf32>
    %c0_14 = arith.constant 0 : index
    %c0_15 = arith.constant 0 : index
    %28 = vector.load %arg6[%c0_14, %c0_15] : memref<8x4xf32, #tpu.memory_space<vmem>>, vector<8x4xf32>
    tpu.vector_store %arg6[%c0_14, %c0_15], %27 {strides = array<i32>} : memref<8x4xf32, #tpu.memory_space<vmem>>, vector<8x4xf32>,
    return
  }
  func.func @transform_0(%arg0: i32) -> (i32, i32) {
    %c0_i32 = arith.constant 0 : i32
    %c0_i32_0 = arith.constant 0 : i32
    return %arg0, %c0_i32 : i32, i32
  }
  func.func @transform_1(%arg0: i32) -> (i32, i32) {
    %c0_i32 = arith.constant 0 : i32
    %c0_i32_0 = arith.constant 0 : i32
    %c0_i32_1 = arith.constant 0 : i32
    return %c0_i32, %c0_i32_0 : i32, i32
  }
  func.func @transform_2(%arg0: i32) -> (i32, i32) {
    %c0_i32 = arith.constant 0 : i32
    %c0_i32_0 = arith.constant 0 : i32
    %c0_i32_1 = arith.constant 0 : i32
    return %c0_i32, %c0_i32_0 : i32, i32
  }
  func.func @transform_3(%arg0: i32) -> (i32, i32) {
    %c0_i32 = arith.constant 0 : i32
    %c0_i32_0 = arith.constant 0 : i32
    %c0_i32_1 = arith.constant 0 : i32
    return %c0_i32, %c0_i32_0 : i32, i32
  }
  func.func @transform_4(%arg0: i32) -> (i32, i32) {
    %c0_i32 = arith.constant 0 : i32
    %c0_i32_0 = arith.constant 0 : i32
    %c0_i32_1 = arith.constant 0 : i32
    return %c0_i32, %c0_i32_0 : i32, i32
  }
  func.func @transform_5(%arg0: i32) -> (i32, i32) {
    %c0_i32 = arith.constant 0 : i32
    %c0_i32_0 = arith.constant 0 : i32
    return %arg0, %c0_i32 : i32, i32
  }
}

</mosaic_0001>

<llo_original>
// kernel: tpu_custom_call.1
$region0: #{tpu_custom_call.1}
  #allocation0 [shape = 'u32[]', space=smem, size = 0x4, offset = 0x4, fixed_abs, tag = 'smem constant byte address 0x4 - core index']
  #allocation1 [shape = 'u32[144,128]{1,0:T(1,128)}', space=vmem, size = 0x12000, scoped, tag = 'internal scratch']
  %s0 = inlined_call_operand.hbm [shape: f32[8,768], index: 0, kind: input, shape index: {}]
  %s1 = inlined_call_operand.hbm [shape: bf16[768,256], index: 1, kind: input, shape index: {}]
  %s2 = inlined_call_operand.vmem [shape: f32[1,256], index: 2, kind: input, shape index: {}]
  %s3 = inlined_call_operand.hbm [shape: bf16[256,128], index: 3, kind: input, shape index: {}]
  %s4 = inlined_call_operand.vmem [shape: f32[1,128], index: 4, kind: input, shape index: {}]
  %s5 = inlined_call_operand.vmem [shape: f32[8,4], index: 5, kind: output, shape index: {}]
  %s6 = sld [smem:[#allocation0]]
  $region42: #{tpu_custom_call.1} parent=0
    _
  %s8 = ssub.s32 1, %s6
  %s9 = scalar_select 0, %s8, %s6
  $region1: #{tpu_custom_call.1} parent=0
    #allocation2 [shape = 'u8[24576]{0}', space=vmem, size = 0x6000, scoped, tag = 'input window, operand 0, single buffered']
    #allocation3 [shape = 's32[1]{0}', space=sflag, size = 0x4, scoped, tag = 'scoped memory for tpu_custom_call.1']
    #allocation4 [shape = 'u8[393216]{0}', space=vmem, size = 0x60000, scoped, tag = 'input window, operand 1, single buffered']
    #allocation5 [shape = 's32[1]{0}', space=sflag, size = 0x4, scoped, tag = 'scoped memory for tpu_custom_call.1']
    #allocation6 [shape = 'u8[65536]{0}', space=vmem, size = 0x10000, scoped, tag = 'input window, operand 3, single buffered']
    %10 = vsyncpa [#allocation3], 0
    %11 = vsyncpa [#allocation5], 0
    // Predicated region
    $region2: #{tpu_custom_call.1} parent=1 // pred_check
      _
    $region3: #{tpu_custom_call.1} parent=1 // pred_check_branch
      %13 = sbr.rel (0) target = $region5
    $region4: #{tpu_custom_call.1} parent=1 // pred_region
      %s15 = ssub.s32 768, 768
      %16 = vsyncadd [#allocation3], %s15
      %s18 = sshll.u32 [#allocation2], 4
      %s19 = int_to_ptr.vmem [resolvable:$true] %s18
      %21 = dma.hbm_to_vmem [thread:$0]  %s0, 768, %s19, [#allocation3]
    $region5: #{tpu_custom_call.1} parent=1 // pred_fallthru
      _
    // Predicated region
    $region6: #{tpu_custom_call.1} parent=1 // pred_check
      _
    $region7: #{tpu_custom_call.1} parent=1 // pred_check_branch
      %23 = sbr.rel (0) target = $region9
    $region8: #{tpu_custom_call.1} parent=1 // pred_region
      %s25 = ssub.s32 12288, 12288
      %26 = vsyncadd [#allocation5], %s25
      %s27 = sshll.u32 [#allocation4], 4
      %s28 = int_to_ptr.vmem [resolvable:$true] %s27
      %33 = dma.hbm_to_vmem [thread:$0]  %s1, 12288, %s28, [#allocation5], 128, 128, 8
    $region9: #{tpu_custom_call.1} parent=1 // pred_fallthru
      _
    // Predicated region
    $region10: #{tpu_custom_call.1} parent=1 // pred_check
      _
    $region11: #{tpu_custom_call.1} parent=1 // pred_check_branch
      %35 = sbr.rel (0) target = $region13
    $region12: #{tpu_custom_call.1} parent=1 // pred_region
      _
    $region13: #{tpu_custom_call.1} parent=1 // pred_fallthru
      _
    // Predicated region
    $region14: #{tpu_custom_call.1} parent=1 // pred_check
      _
    $region15: #{tpu_custom_call.1} parent=1 // pred_check_branch
      %37 = sbr.rel (0) target = $region17
    $region16: #{tpu_custom_call.1} parent=1 // pred_region
      %s39 = ssub.s32 2048, 2048
      %40 = vsyncadd [#allocation5], %s39
      %s41 = sshll.u32 [#allocation6], 4
      %s42 = int_to_ptr.vmem [resolvable:$true] %s41
      %47 = dma.hbm_to_vmem [thread:$0]  %s3, 2048, %s42, [#allocation5], 64, 64, 4
    $region17: #{tpu_custom_call.1} parent=1 // pred_fallthru
      _
    // Predicated region
    $region18: #{tpu_custom_call.1} parent=1 // pred_check
      _
    $region19: #{tpu_custom_call.1} parent=1 // pred_check_branch
      %49 = sbr.rel (0) target = $region21
    $region20: #{tpu_custom_call.1} parent=1 // pred_region
      _
    $region21: #{tpu_custom_call.1} parent=1 // pred_fallthru
      _
    // Predicated region
    $region22: #{tpu_custom_call.1} parent=1 // pred_check
      _
    $region23: #{tpu_custom_call.1} parent=1 // pred_check_branch
      %51 = sbr.rel (0) target = $region25
    $region24: #{tpu_custom_call.1} parent=1 // pred_region
      %52 = dma.done [#allocation3], 768
    $region25: #{tpu_custom_call.1} parent=1 // pred_fallthru
      _
    // Predicated region
    $region26: #{tpu_custom_call.1} parent=1 // pred_check
      _
    $region27: #{tpu_custom_call.1} parent=1 // pred_check_branch
      %54 = sbr.rel (0) target = $region29
    $region28: #{tpu_custom_call.1} parent=1 // pred_region
      %55 = dma.done [#allocation5], 12288
    $region29: #{tpu_custom_call.1} parent=1 // pred_fallthru
      _
    // Predicated region
    $region30: #{tpu_custom_call.1} parent=1 // pred_check
      _
    $region31: #{tpu_custom_call.1} parent=1 // pred_check_branch
      %57 = sbr.rel (0) target = $region33
    $region32: #{tpu_custom_call.1} parent=1 // pred_region
      %58 = dma.done [#allocation5], 2048
    $region33: #{tpu_custom_call.1} parent=1 // pred_fallthru
      _
    %v60 = vld [vmem:[#allocation2] sm:$0xff]
    %v61 = vld [vmem:[#allocation2 + $0x8] sm:$0xff]
    %v62 = vld [vmem:[#allocation2 + $0x10] sm:$0xff]
    %v63 = vld [vmem:[#allocation2 + $0x18] sm:$0xff]
    %v64 = vld [vmem:[#allocation2 + $0x20] sm:$0xff]
    %v65 = vld [vmem:[#allocation2 + $0x28] sm:$0xff]
    %v66 = vpack.c.bf16 %v60, %v60
    %v67 = vpack.c.bf16 %v61, %v61
    %v68 = vpack.c.bf16 %v62, %v62
    %v69 = vpack.c.bf16 %v63, %v63
    %v70 = vpack.c.bf16 %v64, %v64
    %v71 = vpack.c.bf16 %v65, %v65
    %v72 = vld [vmem:[#allocation4] sm:$0xff]
    %v73 = vld [vmem:[#allocation4 + $0x8] sm:$0xff]
    %v74 = vld [vmem:[#allocation4 + $0x10] sm:$0xff]
    %v75 = vld [vmem:[#allocation4 + $0x18] sm:$0xff]
    %v76 = vld [vmem:[#allocation4 + $0x20] sm:$0xff]
    %v77 = vld [vmem:[#allocation4 + $0x28] sm:$0xff]
    %v78 = vld [vmem:[#allocation4 + $0x30] sm:$0xff]
    %v79 = vld [vmem:[#allocation4 + $0x38] sm:$0xff]
    %v80 = vld [vmem:[#allocation4 + $0x40] sm:$0xff]
    %v81 = vld [vmem:[#allocation4 + $0x48] sm:$0xff]
    %v82 = vld [vmem:[#allocation4 + $0x50] sm:$0xff]
    %v83 = vld [vmem:[#allocation4 + $0x58] sm:$0xff]
    %v84 = vld [vmem:[#allocation4 + $0x60] sm:$0xff]
    %v85 = vld [vmem:[#allocation4 + $0x68] sm:$0xff]
    %v86 = vld [vmem:[#allocation4 + $0x70] sm:$0xff]
    %v87 = vld [vmem:[#allocation4 + $0x78] sm:$0xff]
    %v88 = vld [vmem:[#allocation4 + $0x80] sm:$0xff]
    %v89 = vld [vmem:[#allocation4 + $0x88] sm:$0xff]
    %v90 = vld [vmem:[#allocation4 + $0x90] sm:$0xff]
    %v91 = vld [vmem:[#allocation4 + $0x98] sm:$0xff]
    %v92 = vld [vmem:[#allocation4 + $0xa0] sm:$0xff]
    %v93 = vld [vmem:[#allocation4 + $0xa8] sm:$0xff]
    %v94 = vld [vmem:[#allocation4 + $0xb0] sm:$0xff]
    %v95 = vld [vmem:[#allocation4 + $0xb8] sm:$0xff]
    %v96 = vld [vmem:[#allocation4 + $0xc0] sm:$0xff]
    %v97 = vld [vmem:[#allocation4 + $0xc8] sm:$0xff]
    %v98 = vld [vmem:[#allocation4 + $0xd0] sm:$0xff]
    %v99 = vld [vmem:[#allocation4 + $0xd8] sm:$0xff]
    %v100 = vld [vmem:[#allocation4 + $0xe0] sm:$0xff]
    %v101 = vld [vmem:[#allocation4 + $0xe8] sm:$0xff]
    %v102 = vld [vmem:[#allocation4 + $0xf0] sm:$0xff]
    %v103 = vld [vmem:[#allocation4 + $0xf8] sm:$0xff]
    %v104 = vld [vmem:[#allocation4 + $0x100] sm:$0xff]
    %v105 = vld [vmem:[#allocation4 + $0x108] sm:$0xff]
    %v106 = vld [vmem:[#allocation4 + $0x110] sm:$0xff]
    %v107 = vld [vmem:[#allocation4 + $0x118] sm:$0xff]
    %v108 = vld [vmem:[#allocation4 + $0x120] sm:$0xff]
    %v109 = vld [vmem:[#allocation4 + $0x128] sm:$0xff]
    %v110 = vld [vmem:[#allocation4 + $0x130] sm:$0xff]
    %v111 = vld [vmem:[#allocation4 + $0x138] sm:$0xff]
    %v112 = vld [vmem:[#allocation4 + $0x140] sm:$0xff]
    %v113 = vld [vmem:[#allocation4 + $0x148] sm:$0xff]
    %v114 = vld [vmem:[#allocation4 + $0x150] sm:$0xff]
    %v115 = vld [vmem:[#allocation4 + $0x158] sm:$0xff]
    %v116 = vld [vmem:[#allocation4 + $0x160] sm:$0xff]
    %v117 = vld [vmem:[#allocation4 + $0x168] sm:$0xff]
    %v118 = vld [vmem:[#allocation4 + $0x170] sm:$0xff]
    %v119 = vld [vmem:[#allocation4 + $0x178] sm:$0xff]
    %v120 = vld [vmem:[#allocation4 + $0x180] sm:$0xff]
    %v121 = vld [vmem:[#allocation4 + $0x188] sm:$0xff]
    %v122 = vld [vmem:[#allocation4 + $0x190] sm:$0xff]
    %v123 = vld [vmem:[#allocation4 + $0x198] sm:$0xff]
    %v124 = vld [vmem:[#allocation4 + $0x1a0] sm:$0xff]
    %v125 = vld [vmem:[#allocation4 + $0x1a8] sm:$0xff]
    %v126 = vld [vmem:[#allocation4 + $0x1b0] sm:$0xff]
    %v127 = vld [vmem:[#allocation4 + $0x1b8] sm:$0xff]
    %v128 = vld [vmem:[#allocation4 + $0x1c0] sm:$0xff]
    %v129 = vld [vmem:[#allocation4 + $0x1c8] sm:$0xff]
    %v130 = vld [vmem:[#allocation4 + $0x1d0] sm:$0xff]
    %v131 = vld [vmem:[#allocation4 + $0x1d8] sm:$0xff]
    %v132 = vld [vmem:[#allocation4 + $0x1e0] sm:$0xff]
    %v133 = vld [vmem:[#allocation4 + $0x1e8] sm:$0xff]
    %v134 = vld [vmem:[#allocation4 + $0x1f0] sm:$0xff]
    %v135 = vld [vmem:[#allocation4 + $0x1f8] sm:$0xff]
    %v136 = vld [vmem:[#allocation4 + $0x200] sm:$0xff]
    %v137 = vld [vmem:[#allocation4 + $0x208] sm:$0xff]
    %v138 = vld [vmem:[#allocation4 + $0x210] sm:$0xff]
    %v139 = vld [vmem:[#allocation4 + $0x218] sm:$0xff]
    %v140 = vld [vmem:[#allocation4 + $0x220] sm:$0xff]
    %v141 = vld [vmem:[#allocation4 + $0x228] sm:$0xff]
    %v142 = vld [vmem:[#allocation4 + $0x230] sm:$0xff]
    %v143 = vld [vmem:[#allocation4 + $0x238] sm:$0xff]
    %v144 = vld [vmem:[#allocation4 + $0x240] sm:$0xff]
    %v145 = vld [vmem:[#allocation4 + $0x248] sm:$0xff]
    %v146 = vld [vmem:[#allocation4 + $0x250] sm:$0xff]
    %v147 = vld [vmem:[#allocation4 + $0x258] sm:$0xff]
    %v148 = vld [vmem:[#allocation4 + $0x260] sm:$0xff]
    %v149 = vld [vmem:[#allocation4 + $0x268] sm:$0xff]
    %v150 = vld [vmem:[#allocation4 + $0x270] sm:$0xff]
    %v151 = vld [vmem:[#allocation4 + $0x278] sm:$0xff]
    %v152 = vld [vmem:[#allocation4 + $0x280] sm:$0xff]
    %v153 = vld [vmem:[#allocation4 + $0x288] sm:$0xff]
    %v154 = vld [vmem:[#allocation4 + $0x290] sm:$0xff]
    %v155 = vld [vmem:[#allocation4 + $0x298] sm:$0xff]
    %v156 = vld [vmem:[#allocation4 + $0x2a0] sm:$0xff]
    %v157 = vld [vmem:[#allocation4 + $0x2a8] sm:$0xff]
    %v158 = vld [vmem:[#allocation4 + $0x2b0] sm:$0xff]
    %v159 = vld [vmem:[#allocation4 + $0x2b8] sm:$0xff]
    %v160 = vld [vmem:[#allocation4 + $0x2c0] sm:$0xff]
    %v161 = vld [vmem:[#allocation4 + $0x2c8] sm:$0xff]
    %v162 = vld [vmem:[#allocation4 + $0x2d0] sm:$0xff]
    %v163 = vld [vmem:[#allocation4 + $0x2d8] sm:$0xff]
    %v164 = vld [vmem:[#allocation4 + $0x2e0] sm:$0xff]
    %v165 = vld [vmem:[#allocation4 + $0x2e8] sm:$0xff]
    %v166 = vld [vmem:[#allocation4 + $0x2f0] sm:$0xff]
    %v167 = vld [vmem:[#allocation4 + $0x2f8] sm:$0xff]
    %v168 = vld [vmem:[%s2] sm:$0x3]
    %v170 = vlaneseq
    %v171 = vshrl.u32 %v170, 7
    %v172 = vsub.s32 0, %v171
    %v173 = vrot.slane %v168, %v172
    %v174 = vlaneseq
    %v175 = vshrl.u32 %v174, 7
    %v176 = vsub.s32 1, %v175
    %v177 = vrot.slane %v168, %v176
    %v276 = vunpack.c.l.b16 %v72
    %v277 = vunpack.c.h.b16 %v72
    %v278 = vunpack.c.l.b16 %v73
    %v279 = vunpack.c.h.b16 %v73
    %v280 = vunpack.c.l.b16 %v74
    %v281 = vunpack.c.h.b16 %v74
    %v282 = vunpack.c.l.b16 %v75
    %v283 = vunpack.c.h.b16 %v75
    %v284 = vunpack.c.l.b16 %v76
    %v285 = vunpack.c.h.b16 %v76
    %v286 = vunpack.c.l.b16 %v77
    %v287 = vunpack.c.h.b16 %v77
    %v288 = vunpack.c.l.b16 %v78
    %v289 = vunpack.c.h.b16 %v78
    %v290 = vunpack.c.l.b16 %v79
    %v291 = vunpack.c.h.b16 %v79
    %v292 = vunpack.c.l.b16 %v80
    %v293 = vunpack.c.h.b16 %v80
    %v294 = vunpack.c.l.b16 %v81
    %v295 = vunpack.c.h.b16 %v81
    %v296 = vunpack.c.l.b16 %v82
    %v297 = vunpack.c.h.b16 %v82
    %v298 = vunpack.c.l.b16 %v83
    %v299 = vunpack.c.h.b16 %v83
    %v300 = vunpack.c.l.b16 %v84
    %v301 = vunpack.c.h.b16 %v84
    %v302 = vunpack.c.l.b16 %v85
    %v303 = vunpack.c.h.b16 %v85
    %v304 = vunpack.c.l.b16 %v86
    %v305 = vunpack.c.h.b16 %v86
    %v306 = vunpack.c.l.b16 %v87
    %v307 = vunpack.c.h.b16 %v87
    %v308 = vunpack.c.l.b16 %v88
    %v309 = vunpack.c.h.b16 %v88
    %v310 = vunpack.c.l.b16 %v89
    %v311 = vunpack.c.h.b16 %v89
    %v312 = vunpack.c.l.b16 %v90
    %v313 = vunpack.c.h.b16 %v90
    %v314 = vunpack.c.l.b16 %v91
    %v315 = vunpack.c.h.b16 %v91
    %v316 = vunpack.c.l.b16 %v92
    %v317 = vunpack.c.h.b16 %v92
    %v318 = vunpack.c.l.b16 %v93
    %v319 = vunpack.c.h.b16 %v93
    %v320 = vunpack.c.l.b16 %v94
    %v321 = vunpack.c.h.b16 %v94
    %v322 = vunpack.c.l.b16 %v95
    %v323 = vunpack.c.h.b16 %v95
    %v324 = vunpack.c.l.b16 %v96
    %v325 = vunpack.c.h.b16 %v96
    %v326 = vunpack.c.l.b16 %v97
    %v327 = vunpack.c.h.b16 %v97
    %v328 = vunpack.c.l.b16 %v98
    %v329 = vunpack.c.h.b16 %v98
    %v330 = vunpack.c.l.b16 %v99
    %v331 = vunpack.c.h.b16 %v99
    %v332 = vunpack.c.l.b16 %v100
    %v333 = vunpack.c.h.b16 %v100
    %v334 = vunpack.c.l.b16 %v101
    %v335 = vunpack.c.h.b16 %v101
    %v336 = vunpack.c.l.b16 %v102
    %v337 = vunpack.c.h.b16 %v102
    %v338 = vunpack.c.l.b16 %v103
    %v339 = vunpack.c.h.b16 %v103
    %v340 = vunpack.c.l.b16 %v104
    %v341 = vunpack.c.h.b16 %v104
    %v342 = vunpack.c.l.b16 %v105
    %v343 = vunpack.c.h.b16 %v105
    %v344 = vunpack.c.l.b16 %v106
    %v345 = vunpack.c.h.b16 %v106
    %v346 = vunpack.c.l.b16 %v107
    %v347 = vunpack.c.h.b16 %v107
    %v348 = vunpack.c.l.b16 %v108
    %v349 = vunpack.c.h.b16 %v108
    %v350 = vunpack.c.l.b16 %v109
    %v351 = vunpack.c.h.b16 %v109
    %v352 = vunpack.c.l.b16 %v110
    %v353 = vunpack.c.h.b16 %v110
    %v354 = vunpack.c.l.b16 %v111
    %v355 = vunpack.c.h.b16 %v111
    %v356 = vunpack.c.l.b16 %v112
    %v357 = vunpack.c.h.b16 %v112
    %v358 = vunpack.c.l.b16 %v113
    %v359 = vunpack.c.h.b16 %v113
    %v360 = vunpack.c.l.b16 %v114
    %v361 = vunpack.c.h.b16 %v114
    %v362 = vunpack.c.l.b16 %v115
    %v363 = vunpack.c.h.b16 %v115
    %v364 = vunpack.c.l.b16 %v116
    %v365 = vunpack.c.h.b16 %v116
    %v366 = vunpack.c.l.b16 %v117
    %v367 = vunpack.c.h.b16 %v117
    %v368 = vunpack.c.l.b16 %v118
    %v369 = vunpack.c.h.b16 %v118
    %v370 = vunpack.c.l.b16 %v119
    %v371 = vunpack.c.h.b16 %v119
    %v372 = vunpack.c.l.b16 %v120
    %v373 = vunpack.c.h.b16 %v120
    %v374 = vunpack.c.l.b16 %v121
    %v375 = vunpack.c.h.b16 %v121
    %v376 = vunpack.c.l.b16 %v122
    %v377 = vunpack.c.h.b16 %v122
    %v378 = vunpack.c.l.b16 %v123
    %v379 = vunpack.c.h.b16 %v123
    %v380 = vunpack.c.l.b16 %v124
    %v381 = vunpack.c.h.b16 %v124
    %v382 = vunpack.c.l.b16 %v125
    %v383 = vunpack.c.h.b16 %v125
    %v384 = vunpack.c.l.b16 %v126
    %v385 = vunpack.c.h.b16 %v126
    %v386 = vunpack.c.l.b16 %v127
    %v387 = vunpack.c.h.b16 %v127
    %v388 = vunpack.c.l.b16 %v128
    %v389 = vunpack.c.h.b16 %v128
    %v390 = vunpack.c.l.b16 %v129
    %v391 = vunpack.c.h.b16 %v129
    %v392 = vunpack.c.l.b16 %v130
    %v393 = vunpack.c.h.b16 %v130
    %v394 = vunpack.c.l.b16 %v131
    %v395 = vunpack.c.h.b16 %v131
    %v396 = vunpack.c.l.b16 %v132
    %v397 = vunpack.c.h.b16 %v132
    %v398 = vunpack.c.l.b16 %v133
    %v399 = vunpack.c.h.b16 %v133
    %v400 = vunpack.c.l.b16 %v134
    %v401 = vunpack.c.h.b16 %v134
    %v402 = vunpack.c.l.b16 %v135
    %v403 = vunpack.c.h.b16 %v135
    %v404 = vunpack.c.l.b16 %v136
    %v405 = vunpack.c.h.b16 %v136
    %v406 = vunpack.c.l.b16 %v137
    %v407 = vunpack.c.h.b16 %v137
    %v408 = vunpack.c.l.b16 %v138
    %v409 = vunpack.c.h.b16 %v138
    %v410 = vunpack.c.l.b16 %v139
    %v411 = vunpack.c.h.b16 %v139
    %v412 = vunpack.c.l.b16 %v140
    %v413 = vunpack.c.h.b16 %v140
    %v414 = vunpack.c.l.b16 %v141
    %v415 = vunpack.c.h.b16 %v141
    %v416 = vunpack.c.l.b16 %v142
    %v417 = vunpack.c.h.b16 %v142
    %v418 = vunpack.c.l.b16 %v143
    %v419 = vunpack.c.h.b16 %v143
    %v420 = vunpack.c.l.b16 %v144
    %v421 = vunpack.c.h.b16 %v144
    %v422 = vunpack.c.l.b16 %v145
    %v423 = vunpack.c.h.b16 %v145
    %v424 = vunpack.c.l.b16 %v146
    %v425 = vunpack.c.h.b16 %v146
    %v426 = vunpack.c.l.b16 %v147
    %v427 = vunpack.c.h.b16 %v147
    %v428 = vunpack.c.l.b16 %v148
    %v429 = vunpack.c.h.b16 %v148
    %v430 = vunpack.c.l.b16 %v149
    %v431 = vunpack.c.h.b16 %v149
    %v432 = vunpack.c.l.b16 %v150
    %v433 = vunpack.c.h.b16 %v150
    %v434 = vunpack.c.l.b16 %v151
    %v435 = vunpack.c.h.b16 %v151
    %v436 = vunpack.c.l.b16 %v152
    %v437 = vunpack.c.h.b16 %v152
    %v438 = vunpack.c.l.b16 %v153
    %v439 = vunpack.c.h.b16 %v153
    %v440 = vunpack.c.l.b16 %v154
    %v441 = vunpack.c.h.b16 %v154
    %v442 = vunpack.c.l.b16 %v155
    %v443 = vunpack.c.h.b16 %v155
    %v444 = vunpack.c.l.b16 %v156
    %v445 = vunpack.c.h.b16 %v156
    %v446 = vunpack.c.l.b16 %v157
    %v447 = vunpack.c.h.b16 %v157
    %v448 = vunpack.c.l.b16 %v158
    %v449 = vunpack.c.h.b16 %v158
    %v450 = vunpack.c.l.b16 %v159
    %v451 = vunpack.c.h.b16 %v159
    %v452 = vunpack.c.l.b16 %v160
    %v453 = vunpack.c.h.b16 %v160
    %v454 = vunpack.c.l.b16 %v161
    %v455 = vunpack.c.h.b16 %v161
    %v456 = vunpack.c.l.b16 %v162
    %v457 = vunpack.c.h.b16 %v162
    %v458 = vunpack.c.l.b16 %v163
    %v459 = vunpack.c.h.b16 %v163
    %v460 = vunpack.c.l.b16 %v164
    %v461 = vunpack.c.h.b16 %v164
    %v462 = vunpack.c.l.b16 %v165
    %v463 = vunpack.c.h.b16 %v165
    %v464 = vunpack.c.l.b16 %v166
    %v465 = vunpack.c.h.b16 %v166
    %v466 = vunpack.c.l.b16 %v167
    %v467 = vunpack.c.h.b16 %v167
    %v468 = vpack.c.b16 %v278, %v276
    %v469 = vpack.c.b16 %v279, %v277
    %v470 = vpack.c.b16 %v282, %v280
    %v471 = vpack.c.b16 %v283, %v281
    %v472 = vpack.c.b16 %v286, %v284
    %v473 = vpack.c.b16 %v287, %v285
    %v474 = vpack.c.b16 %v290, %v288
    %v475 = vpack.c.b16 %v291, %v289
    %v476 = vpack.c.b16 %v294, %v292
    %v477 = vpack.c.b16 %v295, %v293
    %v478 = vpack.c.b16 %v298, %v296
    %v479 = vpack.c.b16 %v299, %v297
    %v480 = vpack.c.b16 %v302, %v300
    %v481 = vpack.c.b16 %v303, %v301
    %v482 = vpack.c.b16 %v306, %v304
    %v483 = vpack.c.b16 %v307, %v305
    %v484 = vpack.c.b16 %v310, %v308
    %v485 = vpack.c.b16 %v311, %v309
    %v486 = vpack.c.b16 %v314, %v312
    %v487 = vpack.c.b16 %v315, %v313
    %v488 = vpack.c.b16 %v318, %v316
    %v489 = vpack.c.b16 %v319, %v317
    %v490 = vpack.c.b16 %v322, %v320
    %v491 = vpack.c.b16 %v323, %v321
    %v492 = vpack.c.b16 %v326, %v324
    %v493 = vpack.c.b16 %v327, %v325
    %v494 = vpack.c.b16 %v330, %v328
    %v495 = vpack.c.b16 %v331, %v329
    %v496 = vpack.c.b16 %v334, %v332
    %v497 = vpack.c.b16 %v335, %v333
    %v498 = vpack.c.b16 %v338, %v336
    %v499 = vpack.c.b16 %v339, %v337
    %v500 = vpack.c.b16 %v342, %v340
    %v501 = vpack.c.b16 %v343, %v341
    %v502 = vpack.c.b16 %v346, %v344
    %v503 = vpack.c.b16 %v347, %v345
    %v504 = vpack.c.b16 %v350, %v348
    %v505 = vpack.c.b16 %v351, %v349
    %v506 = vpack.c.b16 %v354, %v352
    %v507 = vpack.c.b16 %v355, %v353
    %v508 = vpack.c.b16 %v358, %v356
    %v509 = vpack.c.b16 %v359, %v357
    %v510 = vpack.c.b16 %v362, %v360
    %v511 = vpack.c.b16 %v363, %v361
    %v512 = vpack.c.b16 %v366, %v364
    %v513 = vpack.c.b16 %v367, %v365
    %v514 = vpack.c.b16 %v370, %v368
    %v515 = vpack.c.b16 %v371, %v369
    %v516 = vpack.c.b16 %v374, %v372
    %v517 = vpack.c.b16 %v375, %v373
    %v518 = vpack.c.b16 %v378, %v376
    %v519 = vpack.c.b16 %v379, %v377
    %v520 = vpack.c.b16 %v382, %v380
    %v521 = vpack.c.b16 %v383, %v381
    %v522 = vpack.c.b16 %v386, %v384
    %v523 = vpack.c.b16 %v387, %v385
    %v524 = vpack.c.b16 %v390, %v388
    %v525 = vpack.c.b16 %v391, %v389
    %v526 = vpack.c.b16 %v394, %v392
    %v527 = vpack.c.b16 %v395, %v393
    %v528 = vpack.c.b16 %v398, %v396
    %v529 = vpack.c.b16 %v399, %v397
    %v530 = vpack.c.b16 %v402, %v400
    %v531 = vpack.c.b16 %v403, %v401
    %v532 = vpack.c.b16 %v406, %v404
    %v533 = vpack.c.b16 %v407, %v405
    %v534 = vpack.c.b16 %v410, %v408
    %v535 = vpack.c.b16 %v411, %v409
    %v536 = vpack.c.b16 %v414, %v412
    %v537 = vpack.c.b16 %v415, %v413
    %v538 = vpack.c.b16 %v418, %v416
    %v539 = vpack.c.b16 %v419, %v417
    %v540 = vpack.c.b16 %v422, %v420
    %v541 = vpack.c.b16 %v423, %v421
    %v542 = vpack.c.b16 %v426, %v424
    %v543 = vpack.c.b16 %v427, %v425
    %v544 = vpack.c.b16 %v430, %v428
    %v545 = vpack.c.b16 %v431, %v429
    %v546 = vpack.c.b16 %v434, %v432
    %v547 = vpack.c.b16 %v435, %v433
    %v548 = vpack.c.b16 %v438, %v436
    %v549 = vpack.c.b16 %v439, %v437
    %v550 = vpack.c.b16 %v442, %v440
    %v551 = vpack.c.b16 %v443, %v441
    %v552 = vpack.c.b16 %v446, %v444
    %v553 = vpack.c.b16 %v447, %v445
    %v554 = vpack.c.b16 %v450, %v448
    %v555 = vpack.c.b16 %v451, %v449
    %v556 = vpack.c.b16 %v454, %v452
    %v557 = vpack.c.b16 %v455, %v453
    %v558 = vpack.c.b16 %v458, %v456
    %v559 = vpack.c.b16 %v459, %v457
    %v560 = vpack.c.b16 %v462, %v460
    %v561 = vpack.c.b16 %v463, %v461
    %v562 = vpack.c.b16 %v466, %v464
    %v563 = vpack.c.b16 %v467, %v465
    %660 = vmatprep.subr.bf16.mxu0 %v483
    %661 = vmatpush1.bf16.msra.mxu0 %v482
    %662 = vmatprep.subr.bf16.mxu0 %v481
    %663 = vmatpush1.bf16.msra.mxu0 %v480
    %664 = vmatprep.subr.bf16.mxu0 %v479
    %665 = vmatpush1.bf16.msra.mxu0 %v478
    %666 = vmatprep.subr.bf16.mxu0 %v477
    %667 = vmatpush1.bf16.msra.mxu0 %v476
    %668 = vmatprep.subr.bf16.mxu0 %v475
    %669 = vmatpush1.bf16.msra.mxu0 %v474
    %670 = vmatprep.subr.bf16.mxu0 %v473
    %671 = vmatpush1.bf16.msra.mxu0 %v472
    %672 = vmatprep.subr.bf16.mxu0 %v471
    %673 = vmatpush1.bf16.msra.mxu0 %v470
    %674 = vmatprep.subr.bf16.mxu0 %v469
    %675 = vmatpush1.bf16.msra.mxu0 %v468
    %676 = vmatprep.subr.bf16.mxu0 %v499
    %677 = vmatpush2.bf16.msra.mxu0 %v498
    %678 = vmatprep.subr.bf16.mxu0 %v497
    %679 = vmatpush2.bf16.msra.mxu0 %v496
    %680 = vmatprep.subr.bf16.mxu0 %v495
    %681 = vmatpush2.bf16.msra.mxu0 %v494
    %682 = vmatprep.subr.bf16.mxu0 %v493
    %683 = vmatpush2.bf16.msra.mxu0 %v492
    %684 = vmatprep.subr.bf16.mxu0 %v491
    %685 = vmatpush2.bf16.msra.mxu0 %v490
    %686 = vmatprep.subr.bf16.mxu0 %v489
    %687 = vmatpush2.bf16.msra.mxu0 %v488
    %688 = vmatprep.subr.bf16.mxu0 %v487
    %689 = vmatpush2.bf16.msra.mxu0 %v486
    %690 = vmatprep.subr.bf16.mxu0 %v485
    %691 = vmatpush2.bf16.msra.mxu0 %v484
    %692 = vmatprep.mubr.bf16.mxu0 %v67
    %693 = vmatmul.mubr.bf16.gmra.mxu0 %v66
    %v694 = vpop.f32.mrf.mxu0
    %v695 = vadd.f32 %v173, %v694
    %v696 = vpop.f32.mrf.mxu0
    %v697 = vadd.f32 %v177, %v696
    %v698 = vpop.f32.mrf.mxu0
    %v699 = vpop.f32.mrf.mxu0
    %700 = vdwg.mxu0
    %701 = vmatprep.subr.bf16.mxu0 %v515
    %702 = vmatpush1.bf16.msra.mxu0 %v514
    %703 = vmatprep.subr.bf16.mxu0 %v513
    %704 = vmatpush1.bf16.msra.mxu0 %v512
    %705 = vmatprep.subr.bf16.mxu0 %v511
    %706 = vmatpush1.bf16.msra.mxu0 %v510
    %707 = vmatprep.subr.bf16.mxu0 %v509
    %708 = vmatpush1.bf16.msra.mxu0 %v508
    %709 = vmatprep.subr.bf16.mxu0 %v507
    %710 = vmatpush1.bf16.msra.mxu0 %v506
    %711 = vmatprep.subr.bf16.mxu0 %v505
    %712 = vmatpush1.bf16.msra.mxu0 %v504
    %713 = vmatprep.subr.bf16.mxu0 %v503
    %714 = vmatpush1.bf16.msra.mxu0 %v502
    %715 = vmatprep.subr.bf16.mxu0 %v501
    %716 = vmatpush1.bf16.msra.mxu0 %v500
    %717 = vmatprep.subr.bf16.mxu0 %v531
    %718 = vmatpush2.bf16.msra.mxu0 %v530
    %719 = vmatprep.subr.bf16.mxu0 %v529
    %720 = vmatpush2.bf16.msra.mxu0 %v528
    %721 = vmatprep.subr.bf16.mxu0 %v527
    %722 = vmatpush2.bf16.msra.mxu0 %v526
    %723 = vmatprep.subr.bf16.mxu0 %v525
    %724 = vmatpush2.bf16.msra.mxu0 %v524
    %725 = vmatprep.subr.bf16.mxu0 %v523
    %726 = vmatpush2.bf16.msra.mxu0 %v522
    %727 = vmatprep.subr.bf16.mxu0 %v521
    %728 = vmatpush2.bf16.msra.mxu0 %v520
    %729 = vmatprep.subr.bf16.mxu0 %v519
    %730 = vmatpush2.bf16.msra.mxu0 %v518
    %731 = vmatprep.subr.bf16.mxu0 %v517
    %732 = vmatpush2.bf16.msra.mxu0 %v516
    %733 = vmatprep.mubr.bf16.mxu0 %v69
    %734 = vmatmul.mubr.bf16.gmra.mxu0 %v68
    %v735 = vpop.f32.mrf.mxu0
    %v736 = vadd.f32 %v695, %v735
    %v737 = vpop.f32.mrf.mxu0
    %v738 = vadd.f32 %v697, %v737
    %v739 = vpop.f32.mrf.mxu0
    %v740 = vpop.f32.mrf.mxu0
    %741 = vdwg.mxu0
    %742 = vmatprep.subr.bf16.mxu0 %v547
    %743 = vmatpush1.bf16.msra.mxu0 %v546
    %744 = vmatprep.subr.bf16.mxu0 %v545
    %745 = vmatpush1.bf16.msra.mxu0 %v544
    %746 = vmatprep.subr.bf16.mxu0 %v543
    %747 = vmatpush1.bf16.msra.mxu0 %v542
    %748 = vmatprep.subr.bf16.mxu0 %v541
    %749 = vmatpush1.bf16.msra.mxu0 %v540
    %750 = vmatprep.subr.bf16.mxu0 %v539
    %751 = vmatpush1.bf16.msra.mxu0 %v538
    %752 = vmatprep.subr.bf16.mxu0 %v537
    %753 = vmatpush1.bf16.msra.mxu0 %v536
    %754 = vmatprep.subr.bf16.mxu0 %v535
    %755 = vmatpush1.bf16.msra.mxu0 %v534
    %756 = vmatprep.subr.bf16.mxu0 %v533
    %757 = vmatpush1.bf16.msra.mxu0 %v532
    %758 = vmatprep.subr.bf16.mxu0 %v563
    %759 = vmatpush2.bf16.msra.mxu0 %v562
    %760 = vmatprep.subr.bf16.mxu0 %v561
    %761 = vmatpush2.bf16.msra.mxu0 %v560
    %762 = vmatprep.subr.bf16.mxu0 %v559
    %763 = vmatpush2.bf16.msra.mxu0 %v558
    %764 = vmatprep.subr.bf16.mxu0 %v557
    %765 = vmatpush2.bf16.msra.mxu0 %v556
    %766 = vmatprep.subr.bf16.mxu0 %v555
    %767 = vmatpush2.bf16.msra.mxu0 %v554
    %768 = vmatprep.subr.bf16.mxu0 %v553
    %769 = vmatpush2.bf16.msra.mxu0 %v552
    %770 = vmatprep.subr.bf16.mxu0 %v551
    %771 = vmatpush2.bf16.msra.mxu0 %v550
    %772 = vmatprep.subr.bf16.mxu0 %v549
    %773 = vmatpush2.bf16.msra.mxu0 %v548
    %774 = vmatprep.mubr.bf16.mxu0 %v71
    %775 = vmatmul.mubr.bf16.gmra.mxu0 %v70
    %v776 = vpop.f32.mrf.mxu0
    %v777 = vadd.f32 %v736, %v776
    %v778 = vpop.f32.mrf.mxu0
    %v779 = vadd.f32 %v738, %v778
    %v780 = vpop.f32.mrf.mxu0
    %v781 = vpop.f32.mrf.mxu0
    %782 = vdwg.mxu0
    %vm783 = vcmp.ge.f32.partialorder %v777, 0.0
    %vm784 = vcmp.ge.f32.partialorder %v779, 0.0
    %v785 = vmul.f32 %v777, 0.1
    %v786 = vmul.f32 %v779, 0.1
    %v787 = vsel %vm783, %v777, %v785
    %v788 = vsel %vm784, %v779, %v786
    %v789 = vpack.c.bf16 %v787, %v787
    %v790 = vpack.c.bf16 %v788, %v788
    %v791 = vld [vmem:[#allocation6] sm:$0xf]
    %v792 = vld [vmem:[#allocation6 + $0x4] sm:$0xf]
    %v793 = vld [vmem:[#allocation6 + $0x8] sm:$0xf]
    %v794 = vld [vmem:[#allocation6 + $0xc] sm:$0xf]
    %v795 = vld [vmem:[#allocation6 + $0x10] sm:$0xf]
    %v796 = vld [vmem:[#allocation6 + $0x14] sm:$0xf]
    %v797 = vld [vmem:[#allocation6 + $0x18] sm:$0xf]
    %v798 = vld [vmem:[#allocation6 + $0x1c] sm:$0xf]
    %v799 = vld [vmem:[#allocation6 + $0x20] sm:$0xf]
    %v800 = vld [vmem:[#allocation6 + $0x24] sm:$0xf]
    %v801 = vld [vmem:[#allocation6 + $0x28] sm:$0xf]
    %v802 = vld [vmem:[#allocation6 + $0x2c] sm:$0xf]
    %v803 = vld [vmem:[#allocation6 + $0x30] sm:$0xf]
    %v804 = vld [vmem:[#allocation6 + $0x34] sm:$0xf]
    %v805 = vld [vmem:[#allocation6 + $0x38] sm:$0xf]
    %v806 = vld [vmem:[#allocation6 + $0x3c] sm:$0xf]
    %v807 = vld [vmem:[#allocation6 + $0x40] sm:$0xf]
    %v808 = vld [vmem:[#allocation6 + $0x44] sm:$0xf]
    %v809 = vld [vmem:[#allocation6 + $0x48] sm:$0xf]
    %v810 = vld [vmem:[#allocation6 + $0x4c] sm:$0xf]
    %v811 = vld [vmem:[#allocation6 + $0x50] sm:$0xf]
    %v812 = vld [vmem:[#allocation6 + $0x54] sm:$0xf]
    %v813 = vld [vmem:[#allocation6 + $0x58] sm:$0xf]
    %v814 = vld [vmem:[#allocation6 + $0x5c] sm:$0xf]
    %v815 = vld [vmem:[#allocation6 + $0x60] sm:$0xf]
    %v816 = vld [vmem:[#allocation6 + $0x64] sm:$0xf]
    %v817 = vld [vmem:[#allocation6 + $0x68] sm:$0xf]
    %v818 = vld [vmem:[#allocation6 + $0x6c] sm:$0xf]
    %v819 = vld [vmem:[#allocation6 + $0x70] sm:$0xf]
    %v820 = vld [vmem:[#allocation6 + $0x74] sm:$0xf]
    %v821 = vld [vmem:[#allocation6 + $0x78] sm:$0xf]
    %v822 = vld [vmem:[#allocation6 + $0x7c] sm:$0xf]
    %v823 = vld [vmem:[%s4] sm:$0x1]
    %v825 = vlaneseq
    %v826 = vshrl.u32 %v825, 7
    %v827 = vsub.s32 0, %v826
    %v828 = vrot.slane %v823, %v827
    %v862 = vunpack.c.l.b16 %v791
    %v863 = vunpack.c.l.b16 %v792
    %v864 = vunpack.c.l.b16 %v793
    %v865 = vunpack.c.l.b16 %v794
    %v866 = vunpack.c.l.b16 %v795
    %v867 = vunpack.c.l.b16 %v796
    %v868 = vunpack.c.l.b16 %v797
    %v869 = vunpack.c.l.b16 %v798
    %v870 = vunpack.c.l.b16 %v799
    %v871 = vunpack.c.l.b16 %v800
    %v872 = vunpack.c.l.b16 %v801
    %v873 = vunpack.c.l.b16 %v802
    %v874 = vunpack.c.l.b16 %v803
    %v875 = vunpack.c.l.b16 %v804
    %v876 = vunpack.c.l.b16 %v805
    %v877 = vunpack.c.l.b16 %v806
    %v878 = vunpack.c.l.b16 %v807
    %v879 = vunpack.c.l.b16 %v808
    %v880 = vunpack.c.l.b16 %v809
    %v881 = vunpack.c.l.b16 %v810
    %v882 = vunpack.c.l.b16 %v811
    %v883 = vunpack.c.l.b16 %v812
    %v884 = vunpack.c.l.b16 %v813
    %v885 = vunpack.c.l.b16 %v814
    %v886 = vunpack.c.l.b16 %v815
    %v887 = vunpack.c.l.b16 %v816
    %v888 = vunpack.c.l.b16 %v817
    %v889 = vunpack.c.l.b16 %v818
    %v890 = vunpack.c.l.b16 %v819
    %v891 = vunpack.c.l.b16 %v820
    %v892 = vunpack.c.l.b16 %v821
    %v893 = vunpack.c.l.b16 %v822
    %v894 = vpack.c.b16 %v863, %v862
    %v895 = vpack.c.b16 %v865, %v864
    %v896 = vpack.c.b16 %v867, %v866
    %v897 = vpack.c.b16 %v869, %v868
    %v898 = vpack.c.b16 %v871, %v870
    %v899 = vpack.c.b16 %v873, %v872
    %v900 = vpack.c.b16 %v875, %v874
    %v901 = vpack.c.b16 %v877, %v876
    %v902 = vpack.c.b16 %v879, %v878
    %v903 = vpack.c.b16 %v881, %v880
    %v904 = vpack.c.b16 %v883, %v882
    %v905 = vpack.c.b16 %v885, %v884
    %v906 = vpack.c.b16 %v887, %v886
    %v907 = vpack.c.b16 %v889, %v888
    %v908 = vpack.c.b16 %v891, %v890
    %v909 = vpack.c.b16 %v893, %v892
    %926 = vmatprep.subr.bf16.mxu0 0
    %927 = vmatpush1.bf16.msra.mxu0 %v901
    %928 = vmatprep.subr.bf16.mxu0 0
    %929 = vmatpush1.bf16.msra.mxu0 %v900
    %930 = vmatprep.subr.bf16.mxu0 0
    %931 = vmatpush1.bf16.msra.mxu0 %v899
    %932 = vmatprep.subr.bf16.mxu0 0
    %933 = vmatpush1.bf16.msra.mxu0 %v898
    %934 = vmatprep.subr.bf16.mxu0 0
    %935 = vmatpush1.bf16.msra.mxu0 %v897
    %936 = vmatprep.subr.bf16.mxu0 0
    %937 = vmatpush1.bf16.msra.mxu0 %v896
    %938 = vmatprep.subr.bf16.mxu0 0
    %939 = vmatpush1.bf16.msra.mxu0 %v895
    %940 = vmatprep.subr.bf16.mxu0 0
    %941 = vmatpush1.bf16.msra.mxu0 %v894
    %942 = vmatprep.subr.bf16.mxu0 0
    %943 = vmatpush2.bf16.msra.mxu0 %v909
    %944 = vmatprep.subr.bf16.mxu0 0
    %945 = vmatpush2.bf16.msra.mxu0 %v908
    %946 = vmatprep.subr.bf16.mxu0 0
    %947 = vmatpush2.bf16.msra.mxu0 %v907
    %948 = vmatprep.subr.bf16.mxu0 0
    %949 = vmatpush2.bf16.msra.mxu0 %v906
    %950 = vmatprep.subr.bf16.mxu0 0
    %951 = vmatpush2.bf16.msra.mxu0 %v905
    %952 = vmatprep.subr.bf16.mxu0 0
    %953 = vmatpush2.bf16.msra.mxu0 %v904
    %954 = vmatprep.subr.bf16.mxu0 0
    %955 = vmatpush2.bf16.msra.mxu0 %v903
    %956 = vmatprep.subr.bf16.mxu0 0
    %957 = vmatpush2.bf16.msra.mxu0 %v902
    %958 = vmatprep.mubr.bf16.mxu0 %v790
    %959 = vmatmul.mubr.bf16.gmra.mxu0 %v789
    %v960 = vpop.f32.mrf.mxu0
    %v961 = vadd.f32 %v828, %v960
    %v962 = vpop.f32.mrf.mxu0
    %v963 = vpop.f32.mrf.mxu0
    %v964 = vpop.f32.mrf.mxu0
    %965 = vdwg.mxu0
    %966 = vmax.xlane.f32.xlu0 %v961
    %v967 = vpop.xlane.xlu0 %966
    %v968 = vsub.f32 %v961, %v967
    %v969 = vmul.f32 %v968, 1.442695
    %v970 = vpow.pop %v969
    %971 = vadd.xlane.f32.xlu0 %v970
    %v972 = vpop.xlane.xlu0 %971
    %v973 = vrcp.pop %v972
    %v974 = vmul.f32 %v970, %v973
    %vm975 = vcmask 31744
    %976 = vst.msk [vmem:[%s5] sm:$0xff] %vm975, %v974
    // Predicated region
    $region34: #{tpu_custom_call.1} parent=1 // pred_check
      _
    $region35: #{tpu_custom_call.1} parent=1 // pred_check_branch
      %978 = sbr.rel (0) target = $region37
    $region36: #{tpu_custom_call.1} parent=1 // pred_region
      _
    $region37: #{tpu_custom_call.1} parent=1 // pred_fallthru
      _
    // Predicated region
    $region38: #{tpu_custom_call.1} parent=1 // pred_check
      _
    $region39: #{tpu_custom_call.1} parent=1 // pred_check_branch
      %980 = sbr.rel (0) target = $region41
    $region40: #{tpu_custom_call.1} parent=1 // pred_region
      _
    $region41: #{tpu_custom_call.1} parent=1 // pred_fallthru
      _
    %981 = vsyncpa [#allocation3], 1
    %982 = vsyncpa [#allocation5], 1

</llo_original>
